<compile_context>
chip_gen: v5e
topology: v5e:2x2
jax: 0.10.0
libtpu: 0.0.40
codegen_flags: <defaults>
</compile_context>

<pallas_src>
import functools
import math

import jax
import jax.numpy as jnp
from jax.experimental import pallas as pl
from jax.experimental.pallas import tpu as pltpu

LOG2PI = math.log(2.0 * math.pi)
LANES = 128
TM_MAX = 1024  # max sublane rows per tile (safe for v5e's 16 MiB scoped VMEM)


def _fast_reciprocal(x):
    # Approx EUP reciprocal (own bundle slot) + one Newton-Raphson refinement
    # on the VPU -> ~f32-exact 1/x, cheaper than the full divide lowering.
    r = pl.reciprocal(x, approx=True)
    return r * (2.0 - x * r)


def _num_tensorcores() -> int:
    """Best-effort TensorCore count behind a single JAX TPU device."""
    try:
        info = pltpu.get_tpu_info()
        for attr in ("num_cores", "core_count", "num_tensorcores"):
            val = getattr(info, attr, None)
            if val:
                return max(int(val), 1)
    except Exception:
        pass
    try:
        kind = jax.devices()[0].device_kind.lower()
        # Megacore generations expose 2 TensorCores behind one device.
        if ("v4" in kind) or ("v5p" in kind) or ("v7" in kind):
            return 2
    except Exception:
        pass
    return 1


def _make_loss_kernel(sigma_lower_bound: float, n_valid: int, tm: int,
                      steps_per_split: int):
    def kernel(u_ref, v_ref, su_ref, ku_ref, kv_ref, tu_ref, tv_ref,
               out_ref, acc_ref):
        c = pl.program_id(0)   # parallel (core) axis
        i = pl.program_id(1)   # reduction axis

        @pl.when(i == 0)
        def _():
            acc_ref[...] = jnp.zeros_like(acc_ref)

        u = u_ref[...]
        v = v_ref[...]
        sigma_u = su_ref[...]
        kappa_u = ku_ref[...]
        kappa_v = kv_ref[...]
        target_u = tu_ref[...]
        target_v = tv_ref[...]

        # softplus(sigma_u) + lower_bound (numerically stable, no zeros tile)
        sigma2 = jax.nn.softplus(sigma_u) + sigma_lower_bound

        r_sqnorm2 = kappa_u * kappa_u + kappa_v * kappa_v
        delta_u = u - target_u
        delta_v = v - target_v
        delta_sqnorm = delta_u * delta_u + delta_v * delta_v
        delta_r = delta_u * kappa_u + delta_v * kappa_v
        delta_r_sqnorm = delta_r * delta_r
        denom2 = sigma2 * (sigma2 + r_sqnorm2)

        inv_sigma2 = _fast_reciprocal(sigma2)
        inv_denom2 = _fast_reciprocal(denom2)

        loss = 0.5 * (LOG2PI + jnp.log(denom2)
                      + delta_sqnorm * inv_sigma2
                      - delta_r_sqnorm * inv_denom2)

        # Flat element offset of this tile (int32; wrapper asserts n < 2^31).
        base = (c * steps_per_split + i) * (tm * LANES)

        # Interior tiles: plain vector accumulate, no mask work at all.
        @pl.when(base + tm * LANES <= n_valid)
        def _():
            acc_ref[...] += loss

        # Boundary tile(s): mask the padded / OOB tail with a select (never a
        # multiplicative mask -- OOB garbage may be NaN/Inf).
        @pl.when(base + tm * LANES > n_valid)
        def _():
            sub = jax.lax.broadcasted_iota(jnp.int32, (tm, LANES), 0)
            lane = jax.lax.broadcasted_iota(jnp.int32, (tm, LANES), 1)
            gidx = base + sub * LANES + lane
            acc_ref[...] += jnp.where(gidx < n_valid, loss, 0.0)

        # Finalize: one tiny lane-dense (1, 128) partial per core split.
        @pl.when(i == steps_per_split - 1)
        def _():
            out_ref[...] = jnp.sum(acc_ref[...], axis=0, keepdims=True)

    return kernel


def indep_anisotropic_gaussian_uv_loss(u, v, sigma_u, kappa_u_est,
                                       kappa_v_est, target_u, target_v,
                                       *, sigma_lower_bound: float):
    """Returns scalar f32 loss matching IndepAnisotropicGaussianUVLoss.forward."""
    n = u.size
    assert n >= 1
    # In-kernel flat index math is int32.
    assert n < 2 ** 31 - TM_MAX * LANES

    # ---- tiling: big tiles, <=127 elems padding, 2-way split only on
    # ---- megacore chips (v7x) and only when big enough to amortize it.
    rows = pl.cdiv(n, LANES)
    num_splits = _num_tensorcores() if rows >= 256 else 1
    rows_per_split = pl.cdiv(rows, num_splits)
    steps = max(pl.cdiv(rows_per_split, TM_MAX), 1)
    tm = pl.cdiv(pl.cdiv(rows_per_split, steps), 8) * 8
    last_block = max((rows - 1) // tm, 0)
    n128 = rows * LANES

    def prep(x):
        x = x.reshape(-1).astype(jnp.float32)
        if n128 != n:
            x = jnp.pad(x, (0, n128 - n))   # <=127 elems; fused into the call
        return x.reshape(rows, LANES)

    inputs = [prep(t) for t in (u, v, sigma_u, kappa_u_est,
                                kappa_v_est, target_u, target_v)]

    # Clamp the block index so a (pathological) fully-OOB block aliases the
    # last valid block; the in-kernel mask (driven by program_id, not by the
    # clamped index) zeroes its contribution, so correctness is unaffected.
    def in_map(c, i):
        return (jnp.minimum(c * steps + i, last_block), 0)

    in_spec = pl.BlockSpec((tm, LANES), in_map)
    out_spec = pl.BlockSpec((None, 1, LANES), lambda c, i: (c, 0, 0))

    partial = pl.pallas_call(
        _make_loss_kernel(sigma_lower_bound, n, tm, steps),
        out_shape=jax.ShapeDtypeStruct((num_splits, 1, LANES), jnp.float32),
        grid_spec=pltpu.PrefetchScalarGridSpec(
            num_scalar_prefetch=0,
            grid=(num_splits, steps),
            in_specs=[in_spec] * 7,
            out_specs=out_spec,
            scratch_shapes=[pltpu.VMEM((tm, LANES), jnp.float32)],
        ),
        compiler_params=pltpu.CompilerParams(
            dimension_semantics=("parallel", "arbitrary"),
            allow_input_fusion=[True] * 7,
        ),
    )(*inputs)

    # Tiny final reduce over (num_splits, 1, 128).
    return jnp.sum(partial)


def _reference(u, v, sigma_u, kappa_u_est, kappa_v_est, target_u, target_v,
               sigma_lower_bound):
    sigma2 = jax.nn.softplus(sigma_u) + sigma_lower_bound
    r_sqnorm2 = kappa_u_est ** 2 + kappa_v_est ** 2
    delta_u = u - target_u
    delta_v = v - target_v
    delta_sqnorm = delta_u ** 2 + delta_v ** 2
    delta_r = delta_u * kappa_u_est + delta_v * kappa_v_est
    delta_r_sqnorm = delta_r ** 2
    denom2 = sigma2 * (sigma2 + r_sqnorm2)
    loss = 0.5 * (LOG2PI + jnp.log(denom2)
                  + delta_sqnorm / sigma2 - delta_r_sqnorm / denom2)
    return jnp.sum(loss)


def _run_case(key, n_points, sigma_lower_bound):
    keys = jax.random.split(key, 7)
    u = jax.random.normal(keys[0], (n_points,), jnp.float32)
    v = jax.random.normal(keys[1], (n_points,), jnp.float32)
    sigma_u = jax.random.normal(keys[2], (n_points,), jnp.float32)
    kappa_u = jax.random.normal(keys[3], (n_points,), jnp.float32)
    kappa_v = jax.random.normal(keys[4], (n_points,), jnp.float32)
    target_u = jax.random.uniform(keys[5], (n_points,), jnp.float32)
    target_v = jax.random.uniform(keys[6], (n_points,), jnp.float32)

    loss_fn = jax.jit(functools.partial(
        indep_anisotropic_gaussian_uv_loss,
        sigma_lower_bound=sigma_lower_bound))
    out = jax.block_until_ready(loss_fn(u, v, sigma_u, kappa_u, kappa_v,
                                        target_u, target_v))
    ref = _reference(u, v, sigma_u, kappa_u, kappa_v, target_u, target_v,
                     sigma_lower_bound)
    assert jnp.allclose(out, ref, rtol=5e-4, atol=1e-2), (n_points, out, ref)


if __name__ == "__main__":
    key = jax.random.PRNGKey(0)
    k_small, k_mid, k_large = jax.random.split(key, 3)
    sigma_lower_bound = 0.01

    # Small DensePose-like set of gathered point predictions (not a multiple
    # of 128 -> exercises the ragged last block + in-kernel tail masking).
    _run_case(k_small, 2000, sigma_lower_bound)
    # Exact multiple of the tile (no mask branch taken anywhere).
    _run_case(k_mid, 131072, sigma_lower_bound)
    # Larger flat set: multi-step reduction (and 2-way split on megacore).
    _run_case(k_large, 300000, sigma_lower_bound)

    print("KERNEL_OK")
</pallas_src>

<mosaic_0001>
module attributes {stable_mosaic.version = 11 : i64} {
  func.func @kernel(%arg0: i32, %arg1: i32, %arg2: memref<16x128xf32, #tpu.memory_space<vmem>>, %arg3: memref<16x128xf32, #tpu.memory_space<vmem>>, %arg4: memref<16x128xf32, #tpu.memory_space<vmem>>, %arg5: memref<16x128xf32, #tpu.memory_space<vmem>>, %arg6: memref<16x128xf32, #tpu.memory_space<vmem>>, %arg7: memref<16x128xf32, #tpu.memory_space<vmem>>, %arg8: memref<16x128xf32, #tpu.memory_space<vmem>>, %arg9: memref<1x1x128xf32, #tpu.memory_space<vmem>>, %arg10: memref<16x128xf32, #tpu.memory_space<vmem>>) attributes {dimension_semantics = [#tpu.dimension_semantics<parallel>, #tpu.dimension_semantics<arbitrary>], iteration_bounds = array<i64: 1, 1>, scalar_prefetch = 0 : i64, scratch_operands = 1 : i64, tpu.core_type = #tpu.core_type<tc>, window_params = [{transform_indices = @transform_0, window_bounds = array<i64: 16, 128>}, {transform_indices = @transform_1, window_bounds = array<i64: 16, 128>}, {transform_indices = @transform_2, window_bounds = array<i64: 16, 128>}, {transform_indices = @transform_3, window_bounds = array<i64: 16, 128>}, {transform_indices = @transform_4, window_bounds = array<i64: 16, 128>}, {transform_indices = @transform_5, window_bounds = array<i64: 16, 128>}, {transform_indices = @transform_6, window_bounds = array<i64: 16, 128>}, {transform_indices = @transform_7, window_bounds = array<i64: 1, 1, 128>}]} {
    %c0_i32 = arith.constant 0 : i32
    %0 = arith.cmpi eq, %arg1, %c0_i32 : i32
    %1 = arith.extui %0 : i1 to i32
    %c0_i32_0 = arith.constant 0 : i32
    %2 = arith.cmpi ne, %1, %c0_i32_0 : i32
    scf.if %2 {
      %cst_27 = arith.constant 0.000000e+00 : f32
      %73 = vector.broadcast %cst_27 : f32 to vector<16x128xf32>
      %c0_28 = arith.constant 0 : index
      %c0_29 = arith.constant 0 : index
      %74 = vector.load %arg10[%c0_28, %c0_29] : memref<16x128xf32, #tpu.memory_space<vmem>>, vector<16x128xf32>
      tpu.vector_store %arg10[%c0_28, %c0_29], %73 {strides = array<i32>} : memref<16x128xf32, #tpu.memory_space<vmem>>, vector<16x128xf32>,
    } else {
    }
    %c0 = arith.constant 0 : index
    %c0_1 = arith.constant 0 : index
    %3 = vector.load %arg2[%c0, %c0_1] : memref<16x128xf32, #tpu.memory_space<vmem>>, vector<16x128xf32>
    %c0_2 = arith.constant 0 : index
    %c0_3 = arith.constant 0 : index
    %4 = vector.load %arg3[%c0_2, %c0_3] : memref<16x128xf32, #tpu.memory_space<vmem>>, vector<16x128xf32>
    %c0_4 = arith.constant 0 : index
    %c0_5 = arith.constant 0 : index
    %5 = vector.load %arg4[%c0_4, %c0_5] : memref<16x128xf32, #tpu.memory_space<vmem>>, vector<16x128xf32>
    %c0_6 = arith.constant 0 : index
    %c0_7 = arith.constant 0 : index
    %6 = vector.load %arg5[%c0_6, %c0_7] : memref<16x128xf32, #tpu.memory_space<vmem>>, vector<16x128xf32>
    %c0_8 = arith.constant 0 : index
    %c0_9 = arith.constant 0 : index
    %7 = vector.load %arg6[%c0_8, %c0_9] : memref<16x128xf32, #tpu.memory_space<vmem>>, vector<16x128xf32>
    %c0_10 = arith.constant 0 : index
    %c0_11 = arith.constant 0 : index
    %8 = vector.load %arg7[%c0_10, %c0_11] : memref<16x128xf32, #tpu.memory_space<vmem>>, vector<16x128xf32>
    %c0_12 = arith.constant 0 : index
    %c0_13 = arith.constant 0 : index
    %9 = vector.load %arg8[%c0_12, %c0_13] : memref<16x128xf32, #tpu.memory_space<vmem>>, vector<16x128xf32>
    %cst = arith.constant 0.000000e+00 : f32
    %10 = vector.broadcast %cst : f32 to vector<16x128xf32>
    %11 = arith.maximumf %5, %10 : vector<16x128xf32>
    %12 = vector.broadcast %cst : f32 to vector<16x128xf32>
    %13 = arith.subf %5, %12 : vector<16x128xf32>
    %14 = arith.cmpf one, %13, %13 : vector<16x128xf32>
    %15 = vector.broadcast %cst : f32 to vector<16x128xf32>
    %16 = arith.addf %5, %15 : vector<16x128xf32>
    %17 = math.absf %13 : vector<16x128xf32>
    %cst_14 = arith.constant 0.000000e+00 : f32
    %18 = vector.broadcast %cst_14 : f32 to vector<16x128xf32>
    %19 = arith.subf %18, %17 : vector<16x128xf32>
    %20 = math.exp %19 : vector<16x128xf32>
    %21 = math.log1p %20 : vector<16x128xf32>
    %22 = arith.addf %11, %21 : vector<16x128xf32>
    %23 = arith.select %14, %16, %22 : vector<16x128xi1>, vector<16x128xf32>
    %cst_15 = arith.constant 0.00999999977 : f32
    %24 = vector.broadcast %cst_15 : f32 to vector<16x128xf32>
    %25 = arith.addf %23, %24 : vector<16x128xf32>
    %26 = arith.mulf %6, %6 : vector<16x128xf32>
    %27 = arith.mulf %7, %7 : vector<16x128xf32>
    %28 = arith.addf %26, %27 : vector<16x128xf32>
    %29 = arith.subf %3, %8 : vector<16x128xf32>
    %30 = arith.subf %4, %9 : vector<16x128xf32>
    %31 = arith.mulf %29, %29 : vector<16x128xf32>
    %32 = arith.mulf %30, %30 : vector<16x128xf32>
    %33 = arith.addf %31, %32 : vector<16x128xf32>
    %34 = arith.mulf %29, %6 : vector<16x128xf32>
    %35 = arith.mulf %30, %7 : vector<16x128xf32>
    %36 = arith.addf %34, %35 : vector<16x128xf32>
    %37 = arith.mulf %36, %36 : vector<16x128xf32>
    %38 = arith.addf %25, %28 : vector<16x128xf32>
    %39 = arith.mulf %25, %38 : vector<16x128xf32>
    %40 = tpu.reciprocal %25 {approx = true} : vector<16x128xf32> -> vector<16x128xf32>
    %41 = arith.mulf %25, %40 : vector<16x128xf32>
    %cst_16 = arith.constant 2.000000e+00 : f32
    %42 = vector.broadcast %cst_16 : f32 to vector<16x128xf32>
    %43 = arith.subf %42, %41 : vector<16x128xf32>
    %44 = arith.mulf %40, %43 : vector<16x128xf32>
    %45 = tpu.reciprocal %39 {approx = true} : vector<16x128xf32> -> vector<16x128xf32>
    %46 = arith.mulf %39, %45 : vector<16x128xf32>
    %cst_17 = arith.constant 2.000000e+00 : f32
    %47 = vector.broadcast %cst_17 : f32 to vector<16x128xf32>
    %48 = arith.subf %47, %46 : vector<16x128xf32>
    %49 = arith.mulf %45, %48 : vector<16x128xf32>
    %50 = math.log %39 : vector<16x128xf32>
    %cst_18 = arith.constant 1.83787704 : f32
    %51 = vector.broadcast %cst_18 : f32 to vector<16x128xf32>
    %52 = arith.addf %51, %50 : vector<16x128xf32>
    %53 = arith.mulf %33, %44 : vector<16x128xf32>
    %54 = arith.addf %52, %53 : vector<16x128xf32>
    %55 = arith.mulf %37, %49 : vector<16x128xf32>
    %56 = arith.subf %54, %55 : vector<16x128xf32>
    %cst_19 = arith.constant 5.000000e-01 : f32
    %57 = vector.broadcast %cst_19 : f32 to vector<16x128xf32>
    %58 = arith.mulf %57, %56 : vector<16x128xf32>
    %c1_i32 = arith.constant 1 : i32
    %59 = arith.muli %arg0, %c1_i32 : i32
    %60 = arith.addi %59, %arg1 : i32
    %c2048_i32 = arith.constant 2048 : i32
    %61 = arith.muli %60, %c2048_i32 : i32
    %c2048_i32_20 = arith.constant 2048 : i32
    %62 = arith.addi %61, %c2048_i32_20 : i32
    %c2000_i32 = arith.constant 2000 : i32
    %63 = arith.cmpi sle, %62, %c2000_i32 : i32
    %64 = arith.extui %63 : i1 to i32
    %c0_i32_21 = arith.constant 0 : i32
    %65 = arith.cmpi ne, %64, %c0_i32_21 : i32
    scf.if %65 {
      %c0_27 = arith.constant 0 : index
      %c0_28 = arith.constant 0 : index
      %73 = vector.load %arg10[%c0_27, %c0_28] : memref<16x128xf32, #tpu.memory_space<vmem>>, vector<16x128xf32>
      %74 = arith.addf %73, %58 : vector<16x128xf32>
      %c0_29 = arith.constant 0 : index
      %c0_30 = arith.constant 0 : index
      %75 = vector.load %arg10[%c0_29, %c0_30] : memref<16x128xf32, #tpu.memory_space<vmem>>, vector<16x128xf32>
      tpu.vector_store %arg10[%c0_29, %c0_30], %74 {strides = array<i32>} : memref<16x128xf32, #tpu.memory_space<vmem>>, vector<16x128xf32>,
    } else {
    }
    %c2048_i32_22 = arith.constant 2048 : i32
    %66 = arith.addi %61, %c2048_i32_22 : i32
    %c2000_i32_23 = arith.constant 2000 : i32
    %67 = arith.cmpi sgt, %66, %c2000_i32_23 : i32
    %68 = arith.extui %67 : i1 to i32
    %c0_i32_24 = arith.constant 0 : i32
    %69 = arith.cmpi ne, %68, %c0_i32_24 : i32
    scf.if %69 {
      %73 = tpu.iota {dimensions = array<i32: 0>} : vector<16x128xi32>
      %74 = tpu.iota {dimensions = array<i32: 1>} : vector<16x128xi32>
      %c128_i32 = arith.constant 128 : i32
      %75 = vector.broadcast %c128_i32 : i32 to vector<16x128xi32>
      %76 = arith.muli %73, %75 : vector<16x128xi32>
      %77 = vector.broadcast %61 : i32 to vector<16x128xi32>
      %78 = arith.addi %77, %76 : vector<16x128xi32>
      %79 = arith.addi %78, %74 : vector<16x128xi32>
      %c0_27 = arith.constant 0 : index
      %c0_28 = arith.constant 0 : index
      %80 = vector.load %arg10[%c0_27, %c0_28] : memref<16x128xf32, #tpu.memory_space<vmem>>, vector<16x128xf32>
      %c2000_i32_29 = arith.constant 2000 : i32
      %81 = vector.broadcast %c2000_i32_29 : i32 to vector<16x128xi32>
      %82 = arith.cmpi slt, %79, %81 : vector<16x128xi32>
      %cst_30 = arith.constant 0.000000e+00 : f32
      %83 = vector.broadcast %cst_30 : f32 to vector<16x128xf32>
      %84 = arith.select %82, %58, %83 : vector<16x128xi1>, vector<16x128xf32>
      %85 = arith.addf %80, %84 : vector<16x128xf32>
      %c0_31 = arith.constant 0 : index
      %c0_32 = arith.constant 0 : index
      %86 = vector.load %arg10[%c0_31, %c0_32] : memref<16x128xf32, #tpu.memory_space<vmem>>, vector<16x128xf32>
      tpu.vector_store %arg10[%c0_31, %c0_32], %85 {strides = array<i32>} : memref<16x128xf32, #tpu.memory_space<vmem>>, vector<16x128xf32>,
    } else {
    }
    %c0_i32_25 = arith.constant 0 : i32
    %70 = arith.cmpi eq, %arg1, %c0_i32_25 : i32
    %71 = arith.extui %70 : i1 to i32
    %c0_i32_26 = arith.constant 0 : i32
    %72 = arith.cmpi ne, %71, %c0_i32_26 : i32
    scf.if %72 {
      %c0_27 = arith.constant 0 : index
      %c0_28 = arith.constant 0 : index
      %73 = vector.load %arg10[%c0_27, %c0_28] : memref<16x128xf32, #tpu.memory_space<vmem>>, vector<16x128xf32>
      %cst_29 = arith.constant dense<0.000000e+00> : vector<128xf32>
      %74 = vector.multi_reduction <add>, %73, %cst_29 [0] : vector<16x128xf32> to vector<128xf32>
      %75 = vector.shape_cast %74 : vector<128xf32> to vector<1x128xf32>
      %c0_30 = arith.constant 0 : index
      %c0_31 = arith.constant 0 : index
      %c0_32 = arith.constant 0 : index
      %76 = vector.load %arg9[%c0_30, %c0_31, %c0_32] : memref<1x1x128xf32, #tpu.memory_space<vmem>>, vector<1x1x128xf32>
      %77 = vector.shape_cast %76 : vector<1x1x128xf32> to vector<1x128xf32>
      %78 = vector.shape_cast %75 : vector<1x128xf32> to vector<1x1x128xf32>
      tpu.vector_store %arg9[%c0_30, %c0_31, %c0_32], %78 {strides = array<i32>} : memref<1x1x128xf32, #tpu.memory_space<vmem>>, vector<1x1x128xf32>,
    } else {
    }
    return
  }
  func.func @transform_0(%arg0: i32, %arg1: i32) -> (i32, i32) {
    %c1_i32 = arith.constant 1 : i32
    %0 = arith.muli %arg0, %c1_i32 : i32
    %1 = arith.addi %0, %arg1 : i32
    %c0_i32 = arith.constant 0 : i32
    %2 = arith.minsi %1, %c0_i32 : i32
    %c0_i32_0 = arith.constant 0 : i32
    %c0_i32_1 = arith.constant 0 : i32
    return %2, %c0_i32_0 : i32, i32
  }
  func.func @transform_1(%arg0: i32, %arg1: i32) -> (i32, i32) {
    %c1_i32 = arith.constant 1 : i32
    %0 = arith.muli %arg0, %c1_i32 : i32
    %1 = arith.addi %0, %arg1 : i32
    %c0_i32 = arith.constant 0 : i32
    %2 = arith.minsi %1, %c0_i32 : i32
    %c0_i32_0 = arith.constant 0 : i32
    %c0_i32_1 = arith.constant 0 : i32
    return %2, %c0_i32_0 : i32, i32
  }
  func.func @transform_2(%arg0: i32, %arg1: i32) -> (i32, i32) {
    %c1_i32 = arith.constant 1 : i32
    %0 = arith.muli %arg0, %c1_i32 : i32
    %1 = arith.addi %0, %arg1 : i32
    %c0_i32 = arith.constant 0 : i32
    %2 = arith.minsi %1, %c0_i32 : i32
    %c0_i32_0 = arith.constant 0 : i32
    %c0_i32_1 = arith.constant 0 : i32
    return %2, %c0_i32_0 : i32, i32
  }
  func.func @transform_3(%arg0: i32, %arg1: i32) -> (i32, i32) {
    %c1_i32 = arith.constant 1 : i32
    %0 = arith.muli %arg0, %c1_i32 : i32
    %1 = arith.addi %0, %arg1 : i32
    %c0_i32 = arith.constant 0 : i32
    %2 = arith.minsi %1, %c0_i32 : i32
    %c0_i32_0 = arith.constant 0 : i32
    %c0_i32_1 = arith.constant 0 : i32
    return %2, %c0_i32_0 : i32, i32
  }
  func.func @transform_4(%arg0: i32, %arg1: i32) -> (i32, i32) {
    %c1_i32 = arith.constant 1 : i32
    %0 = arith.muli %arg0, %c1_i32 : i32
    %1 = arith.addi %0, %arg1 : i32
    %c0_i32 = arith.constant 0 : i32
    %2 = arith.minsi %1, %c0_i32 : i32
    %c0_i32_0 = arith.constant 0 : i32
    %c0_i32_1 = arith.constant 0 : i32
    return %2, %c0_i32_0 : i32, i32
  }
  func.func @transform_5(%arg0: i32, %arg1: i32) -> (i32, i32) {
    %c1_i32 = arith.constant 1 : i32
    %0 = arith.muli %arg0, %c1_i32 : i32
    %1 = arith.addi %0, %arg1 : i32
    %c0_i32 = arith.constant 0 : i32
    %2 = arith.minsi %1, %c0_i32 : i32
    %c0_i32_0 = arith.constant 0 : i32
    %c0_i32_1 = arith.constant 0 : i32
    return %2, %c0_i32_0 : i32, i32
  }
  func.func @transform_6(%arg0: i32, %arg1: i32) -> (i32, i32) {
    %c1_i32 = arith.constant 1 : i32
    %0 = arith.muli %arg0, %c1_i32 : i32
    %1 = arith.addi %0, %arg1 : i32
    %c0_i32 = arith.constant 0 : i32
    %2 = arith.minsi %1, %c0_i32 : i32
    %c0_i32_0 = arith.constant 0 : i32
    %c0_i32_1 = arith.constant 0 : i32
    return %2, %c0_i32_0 : i32, i32
  }
  func.func @transform_7(%arg0: i32, %arg1: i32) -> (i32, i32, i32) {
    %c0_i32 = arith.constant 0 : i32
    %c0_i32_0 = arith.constant 0 : i32
    %c0_i32_1 = arith.constant 0 : i32
    return %arg0, %c0_i32, %c0_i32_0 : i32, i32, i32
  }
}

</mosaic_0001>

<llo_original>
// kernel: indep_anisotropic_gaussian_uv_loss.2
$region0: #{indep_anisotropic_gaussian_uv_loss.2}
  #allocation0 [shape = 'u32[]', space=smem, size = 0x4, offset = 0x4, fixed_abs, tag = 'smem constant byte address 0x4 - core index']
  #allocation1 [shape = 'u32[72,128]{1,0:T(1,128)}', space=vmem, size = 0x9000, scoped, tag = 'internal scratch']
  #allocation2 [shape = 'f32[16,128]{1,0:T(8,128)}', space=vmem, size = 0x2000, scoped, tag = 'scratch operand']
  #allocation3 [shape = 'u32[2048]{0}', space=vmem, size = 0x2000, scoped, tag = 'scoped memory for indep_anisotropic_gaussian_uv_loss.2']
  #allocation4 [shape = 'u32[2048]{0}', space=vmem, size = 0x2000, scoped, tag = 'scoped memory for indep_anisotropic_gaussian_uv_loss.2']
  #allocation5 [shape = 'u32[2048]{0}', space=vmem, size = 0x2000, scoped, tag = 'scoped memory for indep_anisotropic_gaussian_uv_loss.2']
  #allocation6 [shape = 'u32[2048]{0}', space=vmem, size = 0x2000, scoped, tag = 'scoped memory for indep_anisotropic_gaussian_uv_loss.2']
  #allocation7 [shape = 'u32[2048]{0}', space=vmem, size = 0x2000, scoped, tag = 'scoped memory for indep_anisotropic_gaussian_uv_loss.2']
  #allocation8 [shape = 'u32[2048]{0}', space=vmem, size = 0x2000, scoped, tag = 'scoped memory for indep_anisotropic_gaussian_uv_loss.2']
  #allocation9 [shape = 'u32[2048]{0}', space=vmem, size = 0x2000, scoped, tag = 'scoped memory for indep_anisotropic_gaussian_uv_loss.2']
  #allocation10 [shape = 'u32[2048]{0}', space=vmem, size = 0x2000, scoped, tag = 'scoped memory for indep_anisotropic_gaussian_uv_loss.2']
  #allocation11 [shape = 'u32[2048]{0}', space=vmem, size = 0x2000, scoped, tag = 'scoped memory for indep_anisotropic_gaussian_uv_loss.2']
  #allocation12 [shape = 'u32[2048]{0}', space=vmem, size = 0x2000, scoped, tag = 'scoped memory for indep_anisotropic_gaussian_uv_loss.2']
  #allocation13 [shape = 'u32[2048]{0}', space=vmem, size = 0x2000, scoped, tag = 'scoped memory for indep_anisotropic_gaussian_uv_loss.2']
  #allocation14 [shape = 'u32[2048]{0}', space=vmem, size = 0x2000, scoped, tag = 'scoped memory for indep_anisotropic_gaussian_uv_loss.2']
  #allocation15 [shape = 'u32[2048]{0}', space=vmem, size = 0x2000, scoped, tag = 'scoped memory for indep_anisotropic_gaussian_uv_loss.2']
  #allocation16 [shape = 'u32[2048]{0}', space=vmem, size = 0x2000, scoped, tag = 'scoped memory for indep_anisotropic_gaussian_uv_loss.2']
  #allocation17 [shape = 'u32[2048]{0}', space=vmem, size = 0x2000, scoped, tag = 'scoped memory for indep_anisotropic_gaussian_uv_loss.2']
  #allocation18 [shape = 'u32[2048]{0}', space=vmem, size = 0x2000, scoped, tag = 'scoped memory for indep_anisotropic_gaussian_uv_loss.2']
  #allocation19 [shape = 'u32[2048]{0}', space=vmem, size = 0x2000, scoped, tag = 'scoped memory for indep_anisotropic_gaussian_uv_loss.2']
  #allocation20 [shape = 'u32[2048]{0}', space=vmem, size = 0x2000, scoped, tag = 'scoped memory for indep_anisotropic_gaussian_uv_loss.2']
  #allocation21 [shape = 'u32[2048]{0}', space=vmem, size = 0x2000, scoped, tag = 'scoped memory for indep_anisotropic_gaussian_uv_loss.2']
  #allocation22 [shape = 'u32[2048]{0}', space=vmem, size = 0x2000, scoped, tag = 'scoped memory for indep_anisotropic_gaussian_uv_loss.2']
  #allocation23 [shape = 'u32[2048]{0}', space=vmem, size = 0x2000, scoped, tag = 'scoped memory for indep_anisotropic_gaussian_uv_loss.2']
  #allocation24 [shape = 'u32[2048]{0}', space=vmem, size = 0x2000, scoped, tag = 'scoped memory for indep_anisotropic_gaussian_uv_loss.2']
  #allocation25 [shape = 'u32[2048]{0}', space=vmem, size = 0x2000, scoped, tag = 'scoped memory for indep_anisotropic_gaussian_uv_loss.2']
  #allocation26 [shape = 'u32[2048]{0}', space=vmem, size = 0x2000, scoped, tag = 'scoped memory for indep_anisotropic_gaussian_uv_loss.2']
  #allocation27 [shape = 'u32[2048]{0}', space=vmem, size = 0x2000, scoped, tag = 'scoped memory for indep_anisotropic_gaussian_uv_loss.2']
  #allocation28 [shape = 'u32[2048]{0}', space=vmem, size = 0x2000, scoped, tag = 'scoped memory for indep_anisotropic_gaussian_uv_loss.2']
  #allocation29 [shape = 'u32[2048]{0}', space=vmem, size = 0x2000, scoped, tag = 'scoped memory for indep_anisotropic_gaussian_uv_loss.2']
  #allocation30 [shape = 'u32[2048]{0}', space=vmem, size = 0x2000, scoped, tag = 'scoped memory for indep_anisotropic_gaussian_uv_loss.2']
  #allocation31 [shape = 'u32[2048]{0}', space=vmem, size = 0x2000, scoped, tag = 'scoped memory for indep_anisotropic_gaussian_uv_loss.2']
  #allocation32 [shape = 'u32[2048]{0}', space=vmem, size = 0x2000, scoped, tag = 'scoped memory for indep_anisotropic_gaussian_uv_loss.2']
  #allocation33 [shape = 'u32[2048]{0}', space=vmem, size = 0x2000, scoped, tag = 'scoped memory for indep_anisotropic_gaussian_uv_loss.2']
  #allocation34 [shape = 'u32[2048]{0}', space=vmem, size = 0x2000, scoped, tag = 'scoped memory for indep_anisotropic_gaussian_uv_loss.2']
  #allocation35 [shape = 'u32[2048]{0}', space=vmem, size = 0x2000, scoped, tag = 'scoped memory for indep_anisotropic_gaussian_uv_loss.2']
  #allocation36 [shape = 'u32[2048]{0}', space=vmem, size = 0x2000, scoped, tag = 'scoped memory for indep_anisotropic_gaussian_uv_loss.2']
  #allocation37 [shape = 'u32[2048]{0}', space=vmem, size = 0x2000, scoped, tag = 'scoped memory for indep_anisotropic_gaussian_uv_loss.2']
  %s0 = inlined_call_operand.hbm [shape: f32[2000], index: 0, kind: input, shape index: {}]
  %s1 = inlined_call_operand.<no memory space> [shape: f32[], index: 1, kind: input, shape index: {}]
  %s2 = inlined_call_operand.hbm [shape: f32[2000], index: 2, kind: input, shape index: {}]
  %s3 = inlined_call_operand.hbm [shape: f32[2000], index: 3, kind: input, shape index: {}]
  %s4 = inlined_call_operand.hbm [shape: f32[2000], index: 4, kind: input, shape index: {}]
  %s5 = inlined_call_operand.hbm [shape: f32[2000], index: 5, kind: input, shape index: {}]
  %s6 = inlined_call_operand.hbm [shape: f32[2000], index: 6, kind: input, shape index: {}]
  %s7 = inlined_call_operand.hbm [shape: f32[2000], index: 7, kind: input, shape index: {}]
  %s8 = inlined_call_operand.vmem [shape: f32[1,1,128], index: 8, kind: output, shape index: {}]
  %s9 = sld [smem:[#allocation0]]
  $region82: #{indep_anisotropic_gaussian_uv_loss.2} parent=0
    _
  %s11 = ssub.s32 1, %s9
  %s12 = scalar_select 0, %s11, %s9
  %v13 = vstv %s1
  %v14 = vstv %s1
  %v15 = vstv %s1
  %v16 = vstv %s1
  %v17 = vstv %s1
  %v18 = vstv %s1
  %v19 = vstv %s1
  $region1: #{indep_anisotropic_gaussian_uv_loss.2} parent=0
    #allocation38 [shape = 'u8[8192]{0}', space=vmem, size = 0x2000, scoped, tag = 'operand span for operand 7']
    #allocation39 [shape = 's32[1]{0}', space=sflag, size = 0x4, scoped, tag = 'scoped memory for indep_anisotropic_gaussian_uv_loss.2']
    #allocation40 [shape = 'u8[8192]{0}', space=vmem, size = 0x2000, scoped, tag = 'operand span for operand 6']
    #allocation41 [shape = 's32[1]{0}', space=sflag, size = 0x4, scoped, tag = 'scoped memory for indep_anisotropic_gaussian_uv_loss.2']
    #allocation42 [shape = 'u8[8192]{0}', space=vmem, size = 0x2000, scoped, tag = 'operand span for operand 5']
    #allocation43 [shape = 'u8[8192]{0}', space=vmem, size = 0x2000, scoped, tag = 'operand span for operand 4']
    #allocation44 [shape = 's32[1]{0}', space=sflag, size = 0x4, scoped, tag = 'scoped memory for indep_anisotropic_gaussian_uv_loss.2']
    #allocation45 [shape = 'u8[8192]{0}', space=vmem, size = 0x2000, scoped, tag = 'operand span for operand 3']
    #allocation46 [shape = 'u8[8192]{0}', space=vmem, size = 0x2000, scoped, tag = 'operand span for operand 2']
    #allocation47 [shape = 's32[1]{0}', space=sflag, size = 0x4, scoped, tag = 'scoped memory for indep_anisotropic_gaussian_uv_loss.2']
    #allocation48 [shape = 'u8[8192]{0}', space=vmem, size = 0x2000, scoped, tag = 'operand span for operand 0']
    #allocation49 [shape = 'u8[8192]{0}', space=vmem, size = 0x2000, dematerialized = true, scoped, tag = 'FusionAdapter Buffer %fusion.7 = f32[16,128]{1,0:T(8,128)} fusion(%param_7.6, %param_1.27), kind=kLoop, calls=%fused_computation.7.clone, metadata={op_name="jit(indep_anisotropic_gaussian_uv_loss)/reshape" stack_frame_id=12}']
    #allocation50 [shape = 'u8[8192]{0}', space=vmem, size = 0x2000, dematerialized = true, scoped, tag = 'FusionAdapter Buffer %fusion.6 = f32[16,128]{1,0:T(8,128)} fusion(%param_6.14, %param_1.27), kind=kLoop, calls=%fused_computation.6.clone, metadata={op_name="jit(indep_anisotropic_gaussian_uv_loss)/reshape" stack_frame_id=12}']
    #allocation51 [shape = 'u8[8192]{0}', space=vmem, size = 0x2000, dematerialized = true, scoped, tag = 'FusionAdapter Buffer %fusion.5 = f32[16,128]{1,0:T(8,128)} fusion(%param_5.13, %param_1.27), kind=kLoop, calls=%fused_computation.5.clone, metadata={op_name="jit(indep_anisotropic_gaussian_uv_loss)/reshape" stack_frame_id=12}']
    #allocation52 [shape = 'u8[8192]{0}', space=vmem, size = 0x2000, dematerialized = true, scoped, tag = 'FusionAdapter Buffer %fusion.4 = f32[16,128]{1,0:T(8,128)} fusion(%param_4.12, %param_1.27), kind=kLoop, calls=%fused_computation.4.clone, metadata={op_name="jit(indep_anisotropic_gaussian_uv_loss)/reshape" stack_frame_id=12}']
    #allocation53 [shape = 'u8[8192]{0}', space=vmem, size = 0x2000, dematerialized = true, scoped, tag = 'FusionAdapter Buffer %fusion.3 = f32[16,128]{1,0:T(8,128)} fusion(%param_3.11, %param_1.27), kind=kLoop, calls=%fused_computation.3.clone, metadata={op_name="jit(indep_anisotropic_gaussian_uv_loss)/reshape" stack_frame_id=12}']
    #allocation54 [shape = 'u8[8192]{0}', space=vmem, size = 0x2000, dematerialized = true, scoped, tag = 'FusionAdapter Buffer %fusion.2 = f32[16,128]{1,0:T(8,128)} fusion(%param_2.10, %param_1.27), kind=kLoop, calls=%fused_computation.2.clone, metadata={op_name="jit(indep_anisotropic_gaussian_uv_loss)/reshape" stack_frame_id=12}']
    #allocation55 [shape = 'u8[8192]{0}', space=vmem, size = 0x2000, dematerialized = true, scoped, tag = 'FusionAdapter Buffer %fusion.1 = f32[16,128]{1,0:T(8,128)} fusion(%param_0.33, %param_1.27), kind=kLoop, calls=%fused_computation.1.clone, metadata={op_name="jit(indep_anisotropic_gaussian_uv_loss)/reshape" stack_frame_id=12}']
    %20 = vsyncpa [#allocation39], 0
    %21 = vsyncpa [#allocation41], 0
    %22 = vsyncpa [#allocation44], 0
    %23 = vsyncpa [#allocation47], 0
    // Predicated region
    $region2: #{indep_anisotropic_gaussian_uv_loss.2} parent=1 // pred_check
      _
    $region3: #{indep_anisotropic_gaussian_uv_loss.2} parent=1 // pred_check_branch
      %25 = sbr.rel (0) target = $region5
    $region4: #{indep_anisotropic_gaussian_uv_loss.2} parent=1 // pred_region
      %s26 = sadd.s32 0, 0
      %p27 = scmp.lt.s32.totalorder %s26, 0
      %s28 = scalar_select %p27, %s26, 0
      %s29 = smul.u32 2, %s28
      %s30 = ssub.s32 2, %s29
      %s31 = smul.u32 8, %s30
      %s32 = ssub.s32 16, %s31
      %s33 = sshll.u32 %s32, 4
      %34 = vsyncadd [#allocation39], %s33
      %p35 = scmp.ne.s32.totalorder 0, %s31
      %s36 = smul.addr %s29, 8
      %s37 = scalar_lea.hbm %s7, %s36
      %s38 = smul.u32 %s30, 8
      %s39 = sshll.u32 %s38, 4
      %s40 = sshll.u32 %s37, 4
      %s41 = int_to_ptr.hbm [resolvable:$true] %s40
      %s42 = sshll.u32 [#allocation38], 4
      %s43 = int_to_ptr.vmem [resolvable:$true] %s42
      %45 = dma.hbm_to_vmem [thread:$0]  (%p35), %s41, %s39, %s43, [#allocation39]
    $region5: #{indep_anisotropic_gaussian_uv_loss.2} parent=1 // pred_fallthru
      _
    // Predicated region
    $region6: #{indep_anisotropic_gaussian_uv_loss.2} parent=1 // pred_check
      _
    $region7: #{indep_anisotropic_gaussian_uv_loss.2} parent=1 // pred_check_branch
      %47 = sbr.rel (0) target = $region9
    $region8: #{indep_anisotropic_gaussian_uv_loss.2} parent=1 // pred_region
      %s48 = sadd.s32 0, 0
      %p49 = scmp.lt.s32.totalorder %s48, 0
      %s50 = scalar_select %p49, %s48, 0
      %s51 = smul.u32 2, %s50
      %s52 = ssub.s32 2, %s51
      %s53 = smul.u32 8, %s52
      %s54 = ssub.s32 16, %s53
      %s55 = sshll.u32 %s54, 4
      %56 = vsyncadd [#allocation41], %s55
      %p57 = scmp.ne.s32.totalorder 0, %s53
      %s58 = smul.addr %s51, 8
      %s59 = scalar_lea.hbm %s6, %s58
      %s60 = smul.u32 %s52, 8
      %s61 = sshll.u32 %s60, 4
      %s62 = sshll.u32 %s59, 4
      %s63 = int_to_ptr.hbm [resolvable:$true] %s62
      %s64 = sshll.u32 [#allocation40], 4
      %s65 = int_to_ptr.vmem [resolvable:$true] %s64
      %67 = dma.hbm_to_vmem [thread:$0]  (%p57), %s63, %s61, %s65, [#allocation41]
    $region9: #{indep_anisotropic_gaussian_uv_loss.2} parent=1 // pred_fallthru
      _
    // Predicated region
    $region10: #{indep_anisotropic_gaussian_uv_loss.2} parent=1 // pred_check
      _
    $region11: #{indep_anisotropic_gaussian_uv_loss.2} parent=1 // pred_check_branch
      %69 = sbr.rel (0) target = $region13
    $region12: #{indep_anisotropic_gaussian_uv_loss.2} parent=1 // pred_region
      %s70 = sadd.s32 0, 0
      %p71 = scmp.lt.s32.totalorder %s70, 0
      %s72 = scalar_select %p71, %s70, 0
      %s73 = smul.u32 2, %s72
      %s74 = ssub.s32 2, %s73
      %s75 = smul.u32 8, %s74
      %s76 = ssub.s32 16, %s75
      %s77 = sshll.u32 %s76, 4
      %78 = vsyncadd [#allocation41], %s77
      %p79 = scmp.ne.s32.totalorder 0, %s75
      %s80 = smul.addr %s73, 8
      %s81 = scalar_lea.hbm %s5, %s80
      %s82 = smul.u32 %s74, 8
      %s83 = sshll.u32 %s82, 4
      %s84 = sshll.u32 %s81, 4
      %s85 = int_to_ptr.hbm [resolvable:$true] %s84
      %s86 = sshll.u32 [#allocation42], 4
      %s87 = int_to_ptr.vmem [resolvable:$true] %s86
      %89 = dma.hbm_to_vmem [thread:$0]  (%p79), %s85, %s83, %s87, [#allocation41]
    $region13: #{indep_anisotropic_gaussian_uv_loss.2} parent=1 // pred_fallthru
      _
    // Predicated region
    $region14: #{indep_anisotropic_gaussian_uv_loss.2} parent=1 // pred_check
      _
    $region15: #{indep_anisotropic_gaussian_uv_loss.2} parent=1 // pred_check_branch
      %91 = sbr.rel (0) target = $region17
    $region16: #{indep_anisotropic_gaussian_uv_loss.2} parent=1 // pred_region
      %s92 = sadd.s32 0, 0
      %p93 = scmp.lt.s32.totalorder %s92, 0
      %s94 = scalar_select %p93, %s92, 0
      %s95 = smul.u32 2, %s94
      %s96 = ssub.s32 2, %s95
      %s97 = smul.u32 8, %s96
      %s98 = ssub.s32 16, %s97
      %s99 = sshll.u32 %s98, 4
      %100 = vsyncadd [#allocation44], %s99
      %p101 = scmp.ne.s32.totalorder 0, %s97
      %s102 = smul.addr %s95, 8
      %s103 = scalar_lea.hbm %s4, %s102
      %s104 = smul.u32 %s96, 8
      %s105 = sshll.u32 %s104, 4
      %s106 = sshll.u32 %s103, 4
      %s107 = int_to_ptr.hbm [resolvable:$true] %s106
      %s108 = sshll.u32 [#allocation43], 4
      %s109 = int_to_ptr.vmem [resolvable:$true] %s108
      %111 = dma.hbm_to_vmem [thread:$0]  (%p101), %s107, %s105, %s109, [#allocation44]
    $region17: #{indep_anisotropic_gaussian_uv_loss.2} parent=1 // pred_fallthru
      _
    // Predicated region
    $region18: #{indep_anisotropic_gaussian_uv_loss.2} parent=1 // pred_check
      _
    $region19: #{indep_anisotropic_gaussian_uv_loss.2} parent=1 // pred_check_branch
      %113 = sbr.rel (0) target = $region21
    $region20: #{indep_anisotropic_gaussian_uv_loss.2} parent=1 // pred_region
      %s114 = sadd.s32 0, 0
      %p115 = scmp.lt.s32.totalorder %s114, 0
      %s116 = scalar_select %p115, %s114, 0
      %s117 = smul.u32 2, %s116
      %s118 = ssub.s32 2, %s117
      %s119 = smul.u32 8, %s118
      %s120 = ssub.s32 16, %s119
      %s121 = sshll.u32 %s120, 4
      %122 = vsyncadd [#allocation44], %s121
      %p123 = scmp.ne.s32.totalorder 0, %s119
      %s124 = smul.addr %s117, 8
      %s125 = scalar_lea.hbm %s3, %s124
      %s126 = smul.u32 %s118, 8
      %s127 = sshll.u32 %s126, 4
      %s128 = sshll.u32 %s125, 4
      %s129 = int_to_ptr.hbm [resolvable:$true] %s128
      %s130 = sshll.u32 [#allocation45], 4
      %s131 = int_to_ptr.vmem [resolvable:$true] %s130
      %133 = dma.hbm_to_vmem [thread:$0]  (%p123), %s129, %s127, %s131, [#allocation44]
    $region21: #{indep_anisotropic_gaussian_uv_loss.2} parent=1 // pred_fallthru
      _
    // Predicated region
    $region22: #{indep_anisotropic_gaussian_uv_loss.2} parent=1 // pred_check
      _
    $region23: #{indep_anisotropic_gaussian_uv_loss.2} parent=1 // pred_check_branch
      %135 = sbr.rel (0) target = $region25
    $region24: #{indep_anisotropic_gaussian_uv_loss.2} parent=1 // pred_region
      %s136 = sadd.s32 0, 0
      %p137 = scmp.lt.s32.totalorder %s136, 0
      %s138 = scalar_select %p137, %s136, 0
      %s139 = smul.u32 2, %s138
      %s140 = ssub.s32 2, %s139
      %s141 = smul.u32 8, %s140
      %s142 = ssub.s32 16, %s141
      %s143 = sshll.u32 %s142, 4
      %144 = vsyncadd [#allocation47], %s143
      %p145 = scmp.ne.s32.totalorder 0, %s141
      %s146 = smul.addr %s139, 8
      %s147 = scalar_lea.hbm %s2, %s146
      %s148 = smul.u32 %s140, 8
      %s149 = sshll.u32 %s148, 4
      %s150 = sshll.u32 %s147, 4
      %s151 = int_to_ptr.hbm [resolvable:$true] %s150
      %s152 = sshll.u32 [#allocation46], 4
      %s153 = int_to_ptr.vmem [resolvable:$true] %s152
      %155 = dma.hbm_to_vmem [thread:$0]  (%p145), %s151, %s149, %s153, [#allocation47]
    $region25: #{indep_anisotropic_gaussian_uv_loss.2} parent=1 // pred_fallthru
      _
    // Predicated region
    $region26: #{indep_anisotropic_gaussian_uv_loss.2} parent=1 // pred_check
      _
    $region27: #{indep_anisotropic_gaussian_uv_loss.2} parent=1 // pred_check_branch
      %157 = sbr.rel (0) target = $region29
    $region28: #{indep_anisotropic_gaussian_uv_loss.2} parent=1 // pred_region
      %s158 = sadd.s32 0, 0
      %p159 = scmp.lt.s32.totalorder %s158, 0
      %s160 = scalar_select %p159, %s158, 0
      %s161 = smul.u32 2, %s160
      %s162 = ssub.s32 2, %s161
      %s163 = smul.u32 8, %s162
      %s164 = ssub.s32 16, %s163
      %s165 = sshll.u32 %s164, 4
      %166 = vsyncadd [#allocation47], %s165
      %p167 = scmp.ne.s32.totalorder 0, %s163
      %s168 = smul.addr %s161, 8
      %s169 = scalar_lea.hbm %s0, %s168
      %s170 = smul.u32 %s162, 8
      %s171 = sshll.u32 %s170, 4
      %s172 = sshll.u32 %s169, 4
      %s173 = int_to_ptr.hbm [resolvable:$true] %s172
      %s174 = sshll.u32 [#allocation48], 4
      %s175 = int_to_ptr.vmem [resolvable:$true] %s174
      %177 = dma.hbm_to_vmem [thread:$0]  (%p167), %s173, %s171, %s175, [#allocation47]
    $region29: #{indep_anisotropic_gaussian_uv_loss.2} parent=1 // pred_fallthru
      _
    // Predicated region
    $region30: #{indep_anisotropic_gaussian_uv_loss.2} parent=1 // pred_check
      _
    $region31: #{indep_anisotropic_gaussian_uv_loss.2} parent=1 // pred_check_branch
      %179 = sbr.rel (0) target = $region33
    $region32: #{indep_anisotropic_gaussian_uv_loss.2} parent=1 // pred_region
      %181 = dma.done [#allocation39], 256
    $region33: #{indep_anisotropic_gaussian_uv_loss.2} parent=1 // pred_fallthru
      _
    // Predicated region
    $region34: #{indep_anisotropic_gaussian_uv_loss.2} parent=1 // pred_check
      _
    $region35: #{indep_anisotropic_gaussian_uv_loss.2} parent=1 // pred_check_branch
      %183 = sbr.rel (0) target = $region37
    $region36: #{indep_anisotropic_gaussian_uv_loss.2} parent=1 // pred_region
      %185 = dma.done [#allocation41], 256
    $region37: #{indep_anisotropic_gaussian_uv_loss.2} parent=1 // pred_fallthru
      _
    // Predicated region
    $region38: #{indep_anisotropic_gaussian_uv_loss.2} parent=1 // pred_check
      _
    $region39: #{indep_anisotropic_gaussian_uv_loss.2} parent=1 // pred_check_branch
      %187 = sbr.rel (0) target = $region41
    $region40: #{indep_anisotropic_gaussian_uv_loss.2} parent=1 // pred_region
      %189 = dma.done [#allocation41], 256
    $region41: #{indep_anisotropic_gaussian_uv_loss.2} parent=1 // pred_fallthru
      _
    // Predicated region
    $region42: #{indep_anisotropic_gaussian_uv_loss.2} parent=1 // pred_check
      _
    $region43: #{indep_anisotropic_gaussian_uv_loss.2} parent=1 // pred_check_branch
      %191 = sbr.rel (0) target = $region45
    $region44: #{indep_anisotropic_gaussian_uv_loss.2} parent=1 // pred_region
      %193 = dma.done [#allocation44], 256
    $region45: #{indep_anisotropic_gaussian_uv_loss.2} parent=1 // pred_fallthru
      _
    // Predicated region
    $region46: #{indep_anisotropic_gaussian_uv_loss.2} parent=1 // pred_check
      _
    $region47: #{indep_anisotropic_gaussian_uv_loss.2} parent=1 // pred_check_branch
      %195 = sbr.rel (0) target = $region49
    $region48: #{indep_anisotropic_gaussian_uv_loss.2} parent=1 // pred_region
      %197 = dma.done [#allocation44], 256
    $region49: #{indep_anisotropic_gaussian_uv_loss.2} parent=1 // pred_fallthru
      _
    // Predicated region
    $region50: #{indep_anisotropic_gaussian_uv_loss.2} parent=1 // pred_check
      _
    $region51: #{indep_anisotropic_gaussian_uv_loss.2} parent=1 // pred_check_branch
      %199 = sbr.rel (0) target = $region53
    $region52: #{indep_anisotropic_gaussian_uv_loss.2} parent=1 // pred_region
      %201 = dma.done [#allocation47], 256
    $region53: #{indep_anisotropic_gaussian_uv_loss.2} parent=1 // pred_fallthru
      _
    // Predicated region
    $region54: #{indep_anisotropic_gaussian_uv_loss.2} parent=1 // pred_check
      _
    $region55: #{indep_anisotropic_gaussian_uv_loss.2} parent=1 // pred_check_branch
      %203 = sbr.rel (0) target = $region57
    $region56: #{indep_anisotropic_gaussian_uv_loss.2} parent=1 // pred_region
      %205 = dma.done [#allocation47], 256
    $region57: #{indep_anisotropic_gaussian_uv_loss.2} parent=1 // pred_fallthru
      _
    %s206 = sadd.s32 0, 0
    %p207 = scmp.lt.s32.totalorder %s206, 0
    %s208 = scalar_select %p207, %s206, 0
    %s209 = smul.u32 2, %s208
    %s210 = ssub.s32 2, %s209
    %s211 = smul.u32 8, %s210
    %s212 = sadd.s32 0, 0
    %p213 = scmp.lt.s32.totalorder %s212, 0
    %s214 = scalar_select %p213, %s212, 0
    %s215 = smul.u32 2, %s214
    %s216 = ssub.s32 2, %s215
    %s217 = smul.u32 8, %s216
    %s218 = sadd.s32 0, 0
    %p219 = scmp.lt.s32.totalorder %s218, 0
    %s220 = scalar_select %p219, %s218, 0
    %s221 = smul.u32 2, %s220
    %s222 = ssub.s32 2, %s221
    %s223 = smul.u32 8, %s222
    %s224 = sadd.s32 0, 0
    %p225 = scmp.lt.s32.totalorder %s224, 0
    %s226 = scalar_select %p225, %s224, 0
    %s227 = smul.u32 2, %s226
    %s228 = ssub.s32 2, %s227
    %s229 = smul.u32 8, %s228
    %s230 = sadd.s32 0, 0
    %p231 = scmp.lt.s32.totalorder %s230, 0
    %s232 = scalar_select %p231, %s230, 0
    %s233 = smul.u32 2, %s232
    %s234 = ssub.s32 2, %s233
    %s235 = smul.u32 8, %s234
    %s236 = sadd.s32 0, 0
    %p237 = scmp.lt.s32.totalorder %s236, 0
    %s238 = scalar_select %p237, %s236, 0
    %s239 = smul.u32 2, %s238
    %s240 = ssub.s32 2, %s239
    %s241 = smul.u32 8, %s240
    %s242 = sadd.s32 0, 0
    %p243 = scmp.lt.s32.totalorder %s242, 0
    %s244 = scalar_select %p243, %s242, 0
    %s245 = smul.u32 2, %s244
    %s246 = ssub.s32 2, %s245
    %s247 = smul.u32 8, %s246
    %v248 = vld [vmem:[#allocation38] sm:$0xff]
    %s249 = smul.addr %s209, 1024
    %v250 = vlaneseq
    %v251 = vstv %s249
    %v252 = vadd.s32 %v250, %v251
    %vm253 = vcmp.lt.s32.totalorder %v252, 2000
    %v254 = vsel %vm253, %v248, %v13
    %s256 = ssub.s32 256, 1
    %257 = vst [vmem:[#allocation49] sm:%s256] %v254
    %s258 = scalar_lea.vmem [#allocation38], 8
    %v259 = vld [vmem:[%s258] sm:$0xff]
    %s260 = sadd.s32 %s209, 1
    %s261 = ssub.s32 1, %s260
    %v262 = vstv %s261
    %vm263 = vcmp.lt.s32.totalorder %v262, 0
    %v264 = vsel %vm263, %v13, %v259
    %s265 = sadd.s32 %s209, 1
    %s266 = smul.addr %s265, 1024
    %v267 = vlaneseq
    %v268 = vstv %s266
    %v269 = vadd.s32 %v267, %v268
    %vm270 = vcmp.lt.s32.totalorder %v269, 2000
    %v271 = vsel %vm270, %v264, %v13
    %s272 = scalar_lea.vmem [#allocation49], 8
    %s274 = ssub.s32 256, 1
    %275 = vst [vmem:[%s272] sm:%s274] %v271
    %v276 = vld [vmem:[#allocation40] sm:$0xff]
    %s277 = smul.addr %s215, 1024
    %v278 = vlaneseq
    %v279 = vstv %s277
    %v280 = vadd.s32 %v278, %v279
    %vm281 = vcmp.lt.s32.totalorder %v280, 2000
    %v282 = vsel %vm281, %v276, %v14
    %s284 = ssub.s32 256, 1
    %285 = vst [vmem:[#allocation50] sm:%s284] %v282
    %s286 = scalar_lea.vmem [#allocation40], 8
    %v287 = vld [vmem:[%s286] sm:$0xff]
    %s288 = sadd.s32 %s215, 1
    %s289 = ssub.s32 1, %s288
    %v290 = vstv %s289
    %vm291 = vcmp.lt.s32.totalorder %v290, 0
    %v292 = vsel %vm291, %v14, %v287
    %s293 = sadd.s32 %s215, 1
    %s294 = smul.addr %s293, 1024
    %v295 = vlaneseq
    %v296 = vstv %s294
    %v297 = vadd.s32 %v295, %v296
    %vm298 = vcmp.lt.s32.totalorder %v297, 2000
    %v299 = vsel %vm298, %v292, %v14
    %s300 = scalar_lea.vmem [#allocation50], 8
    %s302 = ssub.s32 256, 1
    %303 = vst [vmem:[%s300] sm:%s302] %v299
    %v304 = vld [vmem:[#allocation42] sm:$0xff]
    %s305 = smul.addr %s221, 1024
    %v306 = vlaneseq
    %v307 = vstv %s305
    %v308 = vadd.s32 %v306, %v307
    %vm309 = vcmp.lt.s32.totalorder %v308, 2000
    %v310 = vsel %vm309, %v304, %v15
    %s312 = ssub.s32 256, 1
    %313 = vst [vmem:[#allocation51] sm:%s312] %v310
    %s314 = scalar_lea.vmem [#allocation42], 8
    %v315 = vld [vmem:[%s314] sm:$0xff]
    %s316 = sadd.s32 %s221, 1
    %s317 = ssub.s32 1, %s316
    %v318 = vstv %s317
    %vm319 = vcmp.lt.s32.totalorder %v318, 0
    %v320 = vsel %vm319, %v15, %v315
    %s321 = sadd.s32 %s221, 1
    %s322 = smul.addr %s321, 1024
    %v323 = vlaneseq
    %v324 = vstv %s322
    %v325 = vadd.s32 %v323, %v324
    %vm326 = vcmp.lt.s32.totalorder %v325, 2000
    %v327 = vsel %vm326, %v320, %v15
    %s328 = scalar_lea.vmem [#allocation51], 8
    %s330 = ssub.s32 256, 1
    %331 = vst [vmem:[%s328] sm:%s330] %v327
    %v332 = vld [vmem:[#allocation43] sm:$0xff]
    %s333 = smul.addr %s227, 1024
    %v334 = vlaneseq
    %v335 = vstv %s333
    %v336 = vadd.s32 %v334, %v335
    %vm337 = vcmp.lt.s32.totalorder %v336, 2000
    %v338 = vsel %vm337, %v332, %v16
    %s340 = ssub.s32 256, 1
    %341 = vst [vmem:[#allocation52] sm:%s340] %v338
    %s342 = scalar_lea.vmem [#allocation43], 8
    %v343 = vld [vmem:[%s342] sm:$0xff]
    %s344 = sadd.s32 %s227, 1
    %s345 = ssub.s32 1, %s344
    %v346 = vstv %s345
    %vm347 = vcmp.lt.s32.totalorder %v346, 0
    %v348 = vsel %vm347, %v16, %v343
    %s349 = sadd.s32 %s227, 1
    %s350 = smul.addr %s349, 1024
    %v351 = vlaneseq
    %v352 = vstv %s350
    %v353 = vadd.s32 %v351, %v352
    %vm354 = vcmp.lt.s32.totalorder %v353, 2000
    %v355 = vsel %vm354, %v348, %v16
    %s356 = scalar_lea.vmem [#allocation52], 8
    %s358 = ssub.s32 256, 1
    %359 = vst [vmem:[%s356] sm:%s358] %v355
    %v360 = vld [vmem:[#allocation45] sm:$0xff]
    %s361 = smul.addr %s233, 1024
    %v362 = vlaneseq
    %v363 = vstv %s361
    %v364 = vadd.s32 %v362, %v363
    %vm365 = vcmp.lt.s32.totalorder %v364, 2000
    %v366 = vsel %vm365, %v360, %v17
    %s368 = ssub.s32 256, 1
    %369 = vst [vmem:[#allocation53] sm:%s368] %v366
    %s370 = scalar_lea.vmem [#allocation45], 8
    %v371 = vld [vmem:[%s370] sm:$0xff]
    %s372 = sadd.s32 %s233, 1
    %s373 = ssub.s32 1, %s372
    %v374 = vstv %s373
    %vm375 = vcmp.lt.s32.totalorder %v374, 0
    %v376 = vsel %vm375, %v17, %v371
    %s377 = sadd.s32 %s233, 1
    %s378 = smul.addr %s377, 1024
    %v379 = vlaneseq
    %v380 = vstv %s378
    %v381 = vadd.s32 %v379, %v380
    %vm382 = vcmp.lt.s32.totalorder %v381, 2000
    %v383 = vsel %vm382, %v376, %v17
    %s384 = scalar_lea.vmem [#allocation53], 8
    %s386 = ssub.s32 256, 1
    %387 = vst [vmem:[%s384] sm:%s386] %v383
    %v388 = vld [vmem:[#allocation46] sm:$0xff]
    %s389 = smul.addr %s239, 1024
    %v390 = vlaneseq
    %v391 = vstv %s389
    %v392 = vadd.s32 %v390, %v391
    %vm393 = vcmp.lt.s32.totalorder %v392, 2000
    %v394 = vsel %vm393, %v388, %v18
    %s396 = ssub.s32 256, 1
    %397 = vst [vmem:[#allocation54] sm:%s396] %v394
    %s398 = scalar_lea.vmem [#allocation46], 8
    %v399 = vld [vmem:[%s398] sm:$0xff]
    %s400 = sadd.s32 %s239, 1
    %s401 = ssub.s32 1, %s400
    %v402 = vstv %s401
    %vm403 = vcmp.lt.s32.totalorder %v402, 0
    %v404 = vsel %vm403, %v18, %v399
    %s405 = sadd.s32 %s239, 1
    %s406 = smul.addr %s405, 1024
    %v407 = vlaneseq
    %v408 = vstv %s406
    %v409 = vadd.s32 %v407, %v408
    %vm410 = vcmp.lt.s32.totalorder %v409, 2000
    %v411 = vsel %vm410, %v404, %v18
    %s412 = scalar_lea.vmem [#allocation54], 8
    %s414 = ssub.s32 256, 1
    %415 = vst [vmem:[%s412] sm:%s414] %v411
    %v416 = vld [vmem:[#allocation48] sm:$0xff]
    %s417 = smul.addr %s245, 1024
    %v418 = vlaneseq
    %v419 = vstv %s417
    %v420 = vadd.s32 %v418, %v419
    %vm421 = vcmp.lt.s32.totalorder %v420, 2000
    %v422 = vsel %vm421, %v416, %v19
    %s424 = ssub.s32 256, 1
    %425 = vst [vmem:[#allocation55] sm:%s424] %v422
    %s426 = scalar_lea.vmem [#allocation48], 8
    %v427 = vld [vmem:[%s426] sm:$0xff]
    %s428 = sadd.s32 %s245, 1
    %s429 = ssub.s32 1, %s428
    %v430 = vstv %s429
    %vm431 = vcmp.lt.s32.totalorder %v430, 0
    %v432 = vsel %vm431, %v19, %v427
    %s433 = sadd.s32 %s245, 1
    %s434 = smul.addr %s433, 1024
    %v435 = vlaneseq
    %v436 = vstv %s434
    %v437 = vadd.s32 %v435, %v436
    %vm438 = vcmp.lt.s32.totalorder %v437, 2000
    %v439 = vsel %vm438, %v432, %v19
    %s440 = scalar_lea.vmem [#allocation55], 8
    %s442 = ssub.s32 256, 1
    %443 = vst [vmem:[%s440] sm:%s442] %v439
    %p444 = scmp.eq.s32.totalorder 0, 0
    // Predicated region
    $region58: #{indep_anisotropic_gaussian_uv_loss.2} parent=1 // pred_check
      %p445 = pneg %p444
    $region59: #{indep_anisotropic_gaussian_uv_loss.2} parent=1 // pred_check_branch
      %447 = sbr.rel (%p445) target = $region61
    $region60: #{indep_anisotropic_gaussian_uv_loss.2} parent=1 // pred_region
      %448 = vst [vmem:[#allocation2] sm:$0xff] 0.0
      %449 = vst [vmem:[#allocation2 + $0x8] sm:$0xff] 0.0
    $region61: #{indep_anisotropic_gaussian_uv_loss.2} parent=1 // pred_fallthru
      _
    %v450 = vld [vmem:[#allocation49] sm:$0xff]
    %v451 = vld [vmem:[#allocation49 + $0x8] sm:$0xff]
    %v452 = vld [vmem:[#allocation50] sm:$0xff]
    %v453 = vld [vmem:[#allocation50 + $0x8] sm:$0xff]
    %v454 = vld [vmem:[#allocation51] sm:$0xff]
    %v455 = vld [vmem:[#allocation51 + $0x8] sm:$0xff]
    %v456 = vld [vmem:[#allocation52] sm:$0xff]
    %v457 = vld [vmem:[#allocation52 + $0x8] sm:$0xff]
    %v458 = vld [vmem:[#allocation53] sm:$0xff]
    %v459 = vld [vmem:[#allocation53 + $0x8] sm:$0xff]
    %v460 = vld [vmem:[#allocation54] sm:$0xff]
    %v461 = vld [vmem:[#allocation54 + $0x8] sm:$0xff]
    %v462 = vld [vmem:[#allocation55] sm:$0xff]
    %v463 = vld [vmem:[#allocation55 + $0x8] sm:$0xff]
    %v464 = vmax.f32 %v454, 0.0
    %v465 = vmax.f32 %v455, 0.0
    %vm466 = vcmp.ne.f32.partialorder %v454, %v454
    %vm467 = vcmp.ne.f32.partialorder %v455, %v455
    %v468 = vadd.f32 %v454, 0.0
    %v469 = vadd.f32 %v455, 0.0
    %v470 = vand.u32 2147483647, %v454
    %v471 = vand.u32 2147483647, %v455
    %v472 = vsub.f32 0.0, %v470
    %v473 = vsub.f32 0.0, %v471
    %v474 = vmul.f32 %v472, 1.442695
    %v475 = vpow.pop %v474
    %v476 = vmul.f32 %v473, 1.442695
    %v477 = vpow.pop %v476
    %v478 = vadd.f32 %v475, 1.0
    %v479 = vlog2.pop %v478
    %v480 = vmul.f32 %v479, 0.6931472
    %v481 = vmul.f32 -0.5, %v475
    %v482 = vadd.f32 %v481, 1.0
    %v483 = vmul.f32 %v482, %v475
    %v484 = vand.u32 2147483647, %v475
    %vm485 = vcmp.lt.f32.partialorder %v484, 0.0004427343
    %v486 = vsel %vm485, %v483, %v480
    %v487 = vadd.f32 %v477, 1.0
    %v488 = vlog2.pop %v487
    %v489 = vmul.f32 %v488, 0.6931472
    %v490 = vmul.f32 -0.5, %v477
    %v491 = vadd.f32 %v490, 1.0
    %v492 = vmul.f32 %v491, %v477
    %v493 = vand.u32 2147483647, %v477
    %vm494 = vcmp.lt.f32.partialorder %v493, 0.0004427343
    %v495 = vsel %vm494, %v492, %v489
    %v496 = vadd.f32 %v464, %v486
    %v497 = vadd.f32 %v465, %v495
    %v498 = vsel %vm466, %v468, %v496
    %v499 = vsel %vm467, %v469, %v497
    %v500 = vadd.f32 %v498, 0.01
    %v501 = vadd.f32 %v499, 0.01
    %v502 = vmul.f32 %v456, %v456
    %v503 = vmul.f32 %v457, %v457
    %v504 = vmul.f32 %v458, %v458
    %v505 = vmul.f32 %v459, %v459
    %v506 = vadd.f32 %v502, %v504
    %v507 = vadd.f32 %v503, %v505
    %v508 = vsub.f32 %v450, %v460
    %v509 = vsub.f32 %v451, %v461
    %v510 = vsub.f32 %v452, %v462
    %v511 = vsub.f32 %v453, %v463
    %v512 = vmul.f32 %v508, %v508
    %v513 = vmul.f32 %v509, %v509
    %v514 = vmul.f32 %v510, %v510
    %v515 = vmul.f32 %v511, %v511
    %v516 = vadd.f32 %v512, %v514
    %v517 = vadd.f32 %v513, %v515
    %v518 = vmul.f32 %v508, %v456
    %v519 = vmul.f32 %v509, %v457
    %v520 = vmul.f32 %v510, %v458
    %v521 = vmul.f32 %v511, %v459
    %v522 = vadd.f32 %v518, %v520
    %v523 = vadd.f32 %v519, %v521
    %v524 = vmul.f32 %v522, %v522
    %v525 = vmul.f32 %v523, %v523
    %v526 = vadd.f32 %v500, %v506
    %v527 = vadd.f32 %v501, %v507
    %v528 = vmul.f32 %v500, %v526
    %v529 = vmul.f32 %v501, %v527
    %v530 = vrcp.pop %v500
    %v531 = vrcp.pop %v501
    %v532 = vmul.f32 %v500, %v530
    %v533 = vmul.f32 %v501, %v531
    %v534 = vsub.f32 2.0, %v532
    %v535 = vsub.f32 2.0, %v533
    %v536 = vmul.f32 %v530, %v534
    %v537 = vmul.f32 %v531, %v535
    %v538 = vrcp.pop %v528
    %v539 = vrcp.pop %v529
    %v540 = vmul.f32 %v528, %v538
    %v541 = vmul.f32 %v529, %v539
    %v542 = vsub.f32 2.0, %v540
    %v543 = vsub.f32 2.0, %v541
    %v544 = vmul.f32 %v538, %v542
    %v545 = vmul.f32 %v539, %v543
    %v546 = vlog2.pop %v528
    %v547 = vmul.f32 %v546, 0.6931472
    %v548 = vlog2.pop %v529
    %v549 = vmul.f32 %v548, 0.6931472
    %v550 = vadd.f32 %v547, 1.837877
    %v551 = vadd.f32 %v549, 1.837877
    %v552 = vmul.f32 %v516, %v536
    %v553 = vmul.f32 %v517, %v537
    %v554 = vadd.f32 %v550, %v552
    %v555 = vadd.f32 %v551, %v553
    %v556 = vmul.f32 %v524, %v544
    %v557 = vmul.f32 %v525, %v545
    %v558 = vsub.f32 %v554, %v556
    %v559 = vsub.f32 %v555, %v557
    %v560 = vmul.f32 %v558, 0.5
    %v561 = vmul.f32 %v559, 0.5
    %s562 = sadd.s32 0, 0
    %s563 = smul.u32 %s562, 2048
    %s564 = sadd.s32 %s563, 2048
    %p565 = scmp.le.s32.totalorder %s564, 2000
    // Predicated region
    $region62: #{indep_anisotropic_gaussian_uv_loss.2} parent=1 // pred_check
      %p566 = pneg %p565
    $region63: #{indep_anisotropic_gaussian_uv_loss.2} parent=1 // pred_check_branch
      %568 = sbr.rel (%p566) target = $region65
    $region64: #{indep_anisotropic_gaussian_uv_loss.2} parent=1 // pred_region
      %v569 = vld [vmem:[#allocation2] sm:$0xff]
      %v570 = vld [vmem:[#allocation2 + $0x8] sm:$0xff]
      %v571 = vadd.f32 %v569, %v560
      %v572 = vadd.f32 %v570, %v561
      %573 = vst [vmem:[#allocation2] sm:$0xff] %v571
      %574 = vst [vmem:[#allocation2 + $0x8] sm:$0xff] %v572
    $region65: #{indep_anisotropic_gaussian_uv_loss.2} parent=1 // pred_fallthru
      _
    %p575 = scmp.gt.s32.totalorder %s564, 2000
    // Predicated region
    $region66: #{indep_anisotropic_gaussian_uv_loss.2} parent=1 // pred_check
      %p576 = pneg %p575
    $region67: #{indep_anisotropic_gaussian_uv_loss.2} parent=1 // pred_check_branch
      %578 = sbr.rel (%p576) target = $region69
    $region68: #{indep_anisotropic_gaussian_uv_loss.2} parent=1 // pred_region
      %v579 = vlaneseq
      %v580 = vshrl.u32 %v579, 7
      %v581 = vadd.s32 %v580, 8
      %v582 = vlaneseq
      %v583 = vand.u32 %v582, 127
      %v584 = vmul.u32 %v580, 128
      %v585 = vmul.u32 %v581, 128
      %v586 = vstv %s563
      %v587 = vadd.s32 %v586, %v584
      %v588 = vadd.s32 %v586, %v585
      %v589 = vadd.s32 %v587, %v583
      %v590 = vadd.s32 %v588, %v583
      %v591 = vld [vmem:[#allocation2] sm:$0xff]
      %v592 = vld [vmem:[#allocation2 + $0x8] sm:$0xff]
      %vm593 = vcmp.lt.s32.totalorder %v589, 2000
      %vm594 = vcmp.lt.s32.totalorder %v590, 2000
      %v595 = vsel %vm593, %v560, 0.0
      %v596 = vsel %vm594, %v561, 0.0
      %v597 = vadd.f32 %v591, %v595
      %v598 = vadd.f32 %v592, %v596
      %599 = vst [vmem:[#allocation2] sm:$0xff] %v597
      %600 = vst [vmem:[#allocation2 + $0x8] sm:$0xff] %v598
    $region69: #{indep_anisotropic_gaussian_uv_loss.2} parent=1 // pred_fallthru
      _
    // Predicated region
    $region70: #{indep_anisotropic_gaussian_uv_loss.2} parent=1 // pred_check
      %p601 = pneg %p444
    $region71: #{indep_anisotropic_gaussian_uv_loss.2} parent=1 // pred_check_branch
      %603 = sbr.rel (%p601) target = $region73
    $region72: #{indep_anisotropic_gaussian_uv_loss.2} parent=1 // pred_region
      %v604 = vld [vmem:[#allocation2] sm:$0xff]
      %v605 = vld [vmem:[#allocation2 + $0x8] sm:$0xff]
      %v606 = vadd.f32 %v604, %v605
      %v607 = vrot.slane %v606, 4
      %v608 = vadd.f32 %v606, %v607
      %v609 = vrot.slane %v608, 2
      %v610 = vadd.f32 %v608, %v609
      %v611 = vrot.slane %v610, 1
      %v612 = vadd.f32 %v610, %v611
      %613 = vst [vmem:[%s8] sm:$0x1] %v612
    $region73: #{indep_anisotropic_gaussian_uv_loss.2} parent=1 // pred_fallthru
      _
    // Predicated region
    $region74: #{indep_anisotropic_gaussian_uv_loss.2} parent=1 // pred_check
      _
    $region75: #{indep_anisotropic_gaussian_uv_loss.2} parent=1 // pred_check_branch
      %615 = sbr.rel (0) target = $region77
    $region76: #{indep_anisotropic_gaussian_uv_loss.2} parent=1 // pred_region
      _
    $region77: #{indep_anisotropic_gaussian_uv_loss.2} parent=1 // pred_fallthru
      _
    // Predicated region
    $region78: #{indep_anisotropic_gaussian_uv_loss.2} parent=1 // pred_check
      _
    $region79: #{indep_anisotropic_gaussian_uv_loss.2} parent=1 // pred_check_branch
      %617 = sbr.rel (0) target = $region81
    $region80: #{indep_anisotropic_gaussian_uv_loss.2} parent=1 // pred_region
      _
    $region81: #{indep_anisotropic_gaussian_uv_loss.2} parent=1 // pred_fallthru
      _
    %618 = vsyncpa [#allocation39], 1
    %619 = vsyncpa [#allocation41], 1
    %620 = vsyncpa [#allocation44], 1
    %621 = vsyncpa [#allocation47], 1

</llo_original>
